<compile_context>
chip_gen: v6e
topology: v6e:2x2x1
jax: 0.10.0
libtpu: 0.0.40
codegen_flags: <defaults>
</compile_context>

<pallas_src>
import functools

import jax
import jax.numpy as jnp
from jax.experimental import pallas as pl
from jax.experimental.pallas import tpu as pltpu


# ----------------------------- kernel -----------------------------------------


def _stats_kernel(x_ref, out_ref, acc_ref, *, n_total):
    """x_ref: (ROWS_TILE, N_TILE); out_ref: (2, ROWS_TILE); acc_ref: (2, ROWS_TILE) f32."""
    k = pl.program_id(1)

    @pl.when(k == 0)
    def _():
        acc_ref[...] = jnp.zeros_like(acc_ref)

    x = x_ref[...].astype(jnp.float32)            # accumulate in f32 (bf16-safe)
    acc_ref[0, :] += jnp.sum(x, axis=-1)          # sum(x)   — separate row updates,
    acc_ref[1, :] += jnp.sum(x * x, axis=-1)      # sum(x^2) — no per-step stack relayout

    @pl.when(k == pl.num_programs(1) - 1)
    def _():
        n_f = jnp.float32(n_total)
        mean = acc_ref[0, :] * jnp.float32(1.0 / n_total)
        # unbiased variance (matches torch.std default, correction=1).
        # NOTE: n_total == 1 yields 0/0 = NaN, same as PyTorch.
        var = (acc_ref[1, :] - n_f * mean * mean) / jnp.float32(n_total - 1)
        var = jnp.maximum(var, 0.0)               # guard tiny negative from cancellation
        out_ref[0, :] = mean.astype(out_ref.dtype)
        out_ref[1, :] = jnp.sqrt(var).astype(out_ref.dtype)


# ----------------------------- tiling helpers ----------------------------------


def _round_up(x, m):
    return ((x + m - 1) // m) * m


def _pick_rows_tile(r_pad, cap):
    """Largest multiple of 128 that divides r_pad and is <= cap (r_pad % 128 == 0)."""
    t = max(min(cap - cap % 128, r_pad), 128)
    while t > 128:
        if r_pad % t == 0:
            return t
        t -= 128
    return 128  # 128 always divides r_pad


def _tpu_tuning():
    """Per-generation byte budgets / VMEM limits / 2-TC flag (safe defaults otherwise)."""
    kind = ""
    try:
        kind = jax.devices()[0].device_kind.lower()
    except Exception:  # pragma: no cover - defensive: unknown backend
        pass
    if "v7" in kind or "tpu7" in kind:
        # 64 MiB physical VMEM per TC, 2 TCs: keep blocks ~8 MiB, shard rows.
        return dict(block_bytes=8 << 20, vmem_limit=48 << 20, two_cores=True)
    if "v6" in kind:
        # 128 MiB physical VMEM, 1 TC: wider blocks, higher scoped limit.
        return dict(block_bytes=16 << 20, vmem_limit=80 << 20, two_cores=False)
    # v5e / v5p / unknown: ~8 MiB blocks, explicit 64 MiB limit (v5e default is 16 MiB).
    return dict(block_bytes=8 << 20, vmem_limit=64 << 20, two_cores=False)


# ----------------------------- wrapper -----------------------------------------


def stats_net(x, *, rows_tile_max=512):
    """x: (B, C, H, W) float32/bfloat16 -> (B, 2, C) same dtype (mean, unbiased std)."""
    B, C, H, W = x.shape
    N = H * W
    R = B * C
    dtype = x.dtype
    itemsize = jnp.dtype(dtype).itemsize
    tune = _tpu_tuning()

    # Rows: pad to a multiple of 128 so the (2, rows_tile) output block is always
    # lane-dense and legal (last dim divisible by 128). Padded rows give 0/0-free
    # zeros and are sliced off afterwards.
    R_pad = _round_up(R, 128)
    rows_tile = _pick_rows_tile(R_pad, rows_tile_max)
    if tune["two_cores"] and R_pad // rows_tile < 2 and R_pad >= 256:
        # v7x: make sure there are >= 2 row blocks so both TensorCores get work.
        rows_tile = _pick_rows_tile(R_pad, R_pad // 2)

    # Reduction axis: choose n_tile from the byte budget (scales with 1/itemsize so
    # bf16 keeps the same ~MiB-scale DMA per step), then zero-pad N to k_steps*n_tile.
    n_tile_max = max(128, (tune["block_bytes"] // (rows_tile * itemsize)) // 128 * 128)
    k_steps = -(-N // n_tile_max)                         # ceil
    n_tile = _round_up(-(-N // k_steps), 128)             # minimize padded columns
    N_pad = k_steps * n_tile

    xf = x.reshape(R, N)
    if R_pad != R or N_pad != N:
        xf = jnp.pad(xf, ((0, R_pad - R), (0, N_pad - N)))  # zeros are exact for sum/sumsq

    grid = (R_pad // rows_tile, N_pad // n_tile)          # reduction axis (N) last
    kernel = functools.partial(_stats_kernel, n_total=N)

    def _run(dim_semantics):
        return pl.pallas_call(
            kernel,
            out_shape=jax.ShapeDtypeStruct((2, R_pad), dtype),
            grid_spec=pltpu.PrefetchScalarGridSpec(
                num_scalar_prefetch=0,
                grid=grid,
                in_specs=[pl.BlockSpec((rows_tile, n_tile), lambda i, k: (i, k))],
                out_specs=pl.BlockSpec((2, rows_tile), lambda i, k: (0, i)),
                scratch_shapes=[pltpu.VMEM((2, rows_tile), jnp.float32)],
            ),
            compiler_params=pltpu.CompilerParams(
                dimension_semantics=dim_semantics,
                vmem_limit_bytes=tune["vmem_limit"],
            ),
            cost_estimate=pl.CostEstimate(
                flops=3 * R * N,
                transcendentals=0,
                bytes_accessed=itemsize * R * N + 2 * itemsize * R,
            ),
        )(xf)

    if tune["two_cores"] and grid[0] >= 2:
        # v7x: shard row blocks across the 2 TensorCores for ~2x streaming bandwidth.
        try:
            out2 = _run((pltpu.CORE_PARALLEL, pltpu.ARBITRARY))
        except Exception:  # fall back if core-parallel lowering is unavailable
            out2 = _run(("parallel", "arbitrary"))
    else:
        # TODO(synk): v7x small-R shapes (single row block) could split the reduction
        # axis across the 2 cores with a partial-moment output + tiny combine step.
        out2 = _run(("parallel", "arbitrary"))

    # (2, R_pad) -> slice padding -> (2, B, C) -> (B, 2, C)  (matches torch.stack dim=1)
    return jnp.transpose(out2[:, :R].reshape(2, B, C), (1, 0, 2))


# ----------------------------- self test ---------------------------------------


def _reference(x):
    B, C, H, W = x.shape
    xf = x.reshape(B, C, H * W)
    return jnp.stack((jnp.mean(xf, axis=2), jnp.std(xf, axis=2, ddof=1)), axis=1)


if __name__ == "__main__":
    key = jax.random.PRNGKey(0)

    # Small shape consistent with the module's typical use.
    B, C, H, W = 2, 4, 16, 16
    x = jax.random.normal(key, (B, C, H, W), dtype=jnp.float32)
    out = jax.block_until_ready(stats_net(x))
    ref = _reference(x)
    assert out.shape == (B, 2, C), out.shape
    assert jnp.allclose(out, ref, atol=1e-5, rtol=1e-5), "mismatch vs reference (small)"

    # Secondary check that exercises the multi-tile streaming grid
    # (several row blocks and several N blocks -> accumulator path + N padding).
    key2 = jax.random.PRNGKey(0)
    B2, C2, H2, W2 = 2, 320, 96, 96
    x2 = jax.random.normal(key2, (B2, C2, H2, W2), dtype=jnp.float32)
    out2 = jax.block_until_ready(stats_net(x2))
    ref2 = _reference(x2)
    assert out2.shape == (B2, 2, C2), out2.shape
    assert jnp.allclose(out2, ref2, atol=1e-4, rtol=1e-4), "mismatch vs reference (tiled)"

    print("KERNEL_OK")
</pallas_src>

<mosaic_0001>
module attributes {stable_mosaic.version = 11 : i64} {
  func.func @_stats_kernel(%arg0: i32, %arg1: i32, %arg2: memref<128x256xf32, #tpu.memory_space<vmem>>, %arg3: memref<2x128xf32, #tpu.memory_space<vmem>>, %arg4: memref<2x128xf32, #tpu.memory_space<vmem>>) attributes {dimension_semantics = [#tpu.dimension_semantics<parallel>, #tpu.dimension_semantics<arbitrary>], iteration_bounds = array<i64: 1, 1>, scalar_prefetch = 0 : i64, scratch_operands = 1 : i64, tpu.core_type = #tpu.core_type<tc>, window_params = [{transform_indices = @transform_0, window_bounds = array<i64: 128, 256>}, {transform_indices = @transform_1, window_bounds = array<i64: 2, 128>}]} {
    %c0_i32 = arith.constant 0 : i32
    %0 = arith.cmpi eq, %arg1, %c0_i32 : i32
    %1 = arith.extui %0 : i1 to i32
    %c0_i32_0 = arith.constant 0 : i32
    %2 = arith.cmpi ne, %1, %c0_i32_0 : i32
    scf.if %2 {
      %cst_12 = arith.constant 0.000000e+00 : f32
      %22 = vector.broadcast %cst_12 : f32 to vector<2x128xf32>
      %c0_13 = arith.constant 0 : index
      %c0_14 = arith.constant 0 : index
      %23 = vector.load %arg4[%c0_13, %c0_14] : memref<2x128xf32, #tpu.memory_space<vmem>>, vector<2x128xf32>
      tpu.vector_store %arg4[%c0_13, %c0_14], %22 {strides = array<i32>} : memref<2x128xf32, #tpu.memory_space<vmem>>, vector<2x128xf32>,
    } else {
    }
    %c0 = arith.constant 0 : index
    %c0_1 = arith.constant 0 : index
    %3 = vector.load %arg2[%c0, %c0_1] : memref<128x256xf32, #tpu.memory_space<vmem>>, vector<128x256xf32>
    %c0_2 = arith.constant 0 : index
    %c0_3 = arith.constant 0 : index
    %4 = vector.load %arg4[%c0_2, %c0_3] : memref<2x128xf32, #tpu.memory_space<vmem>>, vector<1x128xf32>
    %5 = vector.shape_cast %4 : vector<1x128xf32> to vector<128xf32>
    %cst = arith.constant dense<0.000000e+00> : vector<128xf32>
    %6 = vector.multi_reduction <add>, %3, %cst [1] : vector<128x256xf32> to vector<128xf32>
    %7 = arith.addf %5, %6 : vector<128xf32>
    %c0_4 = arith.constant 0 : index
    %c0_5 = arith.constant 0 : index
    %8 = vector.load %arg4[%c0_4, %c0_5] : memref<2x128xf32, #tpu.memory_space<vmem>>, vector<1x128xf32>
    %9 = vector.shape_cast %8 : vector<1x128xf32> to vector<128xf32>
    %10 = vector.shape_cast %7 : vector<128xf32> to vector<1x128xf32>
    tpu.vector_store %arg4[%c0_4, %c0_5], %10 {strides = array<i32>} : memref<2x128xf32, #tpu.memory_space<vmem>>, vector<1x128xf32>,
    %c1 = arith.constant 1 : index
    %c0_6 = arith.constant 0 : index
    %11 = vector.load %arg4[%c1, %c0_6] : memref<2x128xf32, #tpu.memory_space<vmem>>, vector<1x128xf32>
    %12 = vector.shape_cast %11 : vector<1x128xf32> to vector<128xf32>
    %13 = arith.mulf %3, %3 : vector<128x256xf32>
    %cst_7 = arith.constant dense<0.000000e+00> : vector<128xf32>
    %14 = vector.multi_reduction <add>, %13, %cst_7 [1] : vector<128x256xf32> to vector<128xf32>
    %15 = arith.addf %12, %14 : vector<128xf32>
    %c1_8 = arith.constant 1 : index
    %c0_9 = arith.constant 0 : index
    %16 = vector.load %arg4[%c1_8, %c0_9] : memref<2x128xf32, #tpu.memory_space<vmem>>, vector<1x128xf32>
    %17 = vector.shape_cast %16 : vector<1x128xf32> to vector<128xf32>
    %18 = vector.shape_cast %15 : vector<128xf32> to vector<1x128xf32>
    tpu.vector_store %arg4[%c1_8, %c0_9], %18 {strides = array<i32>} : memref<2x128xf32, #tpu.memory_space<vmem>>, vector<1x128xf32>,
    %c0_i32_10 = arith.constant 0 : i32
    %19 = arith.cmpi eq, %arg1, %c0_i32_10 : i32
    %20 = arith.extui %19 : i1 to i32
    %c0_i32_11 = arith.constant 0 : i32
    %21 = arith.cmpi ne, %20, %c0_i32_11 : i32
    scf.if %21 {
      %c0_12 = arith.constant 0 : index
      %c0_13 = arith.constant 0 : index
      %22 = vector.load %arg4[%c0_12, %c0_13] : memref<2x128xf32, #tpu.memory_space<vmem>>, vector<1x128xf32>
      %23 = vector.shape_cast %22 : vector<1x128xf32> to vector<128xf32>
      %cst_14 = arith.constant 3.906250e-03 : f32
      %24 = vector.broadcast %cst_14 : f32 to vector<128xf32>
      %25 = arith.mulf %23, %24 : vector<128xf32>
      %c1_15 = arith.constant 1 : index
      %c0_16 = arith.constant 0 : index
      %26 = vector.load %arg4[%c1_15, %c0_16] : memref<2x128xf32, #tpu.memory_space<vmem>>, vector<1x128xf32>
      %27 = vector.shape_cast %26 : vector<1x128xf32> to vector<128xf32>
      %cst_17 = arith.constant 2.560000e+02 : f32
      %28 = vector.broadcast %cst_17 : f32 to vector<128xf32>
      %29 = arith.mulf %28, %25 : vector<128xf32>
      %30 = arith.mulf %29, %25 : vector<128xf32>
      %31 = arith.subf %27, %30 : vector<128xf32>
      %cst_18 = arith.constant 2.550000e+02 : f32
      %32 = vector.broadcast %cst_18 : f32 to vector<128xf32>
      %33 = arith.divf %31, %32 : vector<128xf32>
      %cst_19 = arith.constant 0.000000e+00 : f32
      %34 = vector.broadcast %cst_19 : f32 to vector<128xf32>
      %35 = arith.maximumf %33, %34 : vector<128xf32>
      %c0_20 = arith.constant 0 : index
      %c0_21 = arith.constant 0 : index
      %36 = vector.load %arg3[%c0_20, %c0_21] : memref<2x128xf32, #tpu.memory_space<vmem>>, vector<1x128xf32>
      %37 = vector.shape_cast %36 : vector<1x128xf32> to vector<128xf32>
      %38 = vector.shape_cast %25 : vector<128xf32> to vector<1x128xf32>
      tpu.vector_store %arg3[%c0_20, %c0_21], %38 {strides = array<i32>} : memref<2x128xf32, #tpu.memory_space<vmem>>, vector<1x128xf32>,
      %39 = math.sqrt %35 : vector<128xf32>
      %c1_22 = arith.constant 1 : index
      %c0_23 = arith.constant 0 : index
      %40 = vector.load %arg3[%c1_22, %c0_23] : memref<2x128xf32, #tpu.memory_space<vmem>>, vector<1x128xf32>
      %41 = vector.shape_cast %40 : vector<1x128xf32> to vector<128xf32>
      %42 = vector.shape_cast %39 : vector<128xf32> to vector<1x128xf32>
      tpu.vector_store %arg3[%c1_22, %c0_23], %42 {strides = array<i32>} : memref<2x128xf32, #tpu.memory_space<vmem>>, vector<1x128xf32>,
    } else {
    }
    return
  }
  func.func @transform_0(%arg0: i32, %arg1: i32) -> (i32, i32) {
    %c0_i32 = arith.constant 0 : i32
    return %arg0, %arg1 : i32, i32
  }
  func.func @transform_1(%arg0: i32, %arg1: i32) -> (i32, i32) {
    %c0_i32 = arith.constant 0 : i32
    %c0_i32_0 = arith.constant 0 : i32
    return %c0_i32, %arg0 : i32, i32
  }
}

</mosaic_0001>

<llo_original>
// kernel: tpu_custom_call.1
$region0: #{tpu_custom_call.1}
  #allocation0 [shape = 'u32[]', space=smem, size = 0x4, offset = 0x4, fixed_abs, tag = 'smem constant byte address 0x4 - core index']
  #allocation1 [shape = 'u32[144,128]{1,0:T(1,128)}', space=vmem, size = 0x12000, scoped, tag = 'internal scratch']
  #allocation2 [shape = 'f32[2,128]{1,0:T(2,128)}', space=vmem, size = 0x400, scoped, tag = 'scratch operand']
  %s0 = inlined_call_operand.hbm [shape: f32[128,256], index: 0, kind: input, shape index: {}]
  %s1 = inlined_call_operand.hbm [shape: f32[2,128], index: 1, kind: output, shape index: {}]
  %s2 = sld [smem:[#allocation0]]
  $region26: #{tpu_custom_call.1} parent=0
    _
  %s4 = ssub.s32 1, %s2
  %s5 = scalar_select 0, %s4, %s2
  $region1: #{tpu_custom_call.1} parent=0
    #allocation3 [shape = 'u8[131072]{0}', space=vmem, size = 0x20000, scoped, tag = 'input window, operand 0, single buffered']
    #allocation4 [shape = 's32[1]{0}', space=sflag, size = 0x4, scoped, tag = 'scoped memory for tpu_custom_call.1']
    #allocation5 [shape = 's32[1]{0}', space=sflag, size = 0x4, scoped, tag = 'scoped memory for tpu_custom_call.1']
    #allocation6 [shape = 'u8[1024]{0}', space=vmem, size = 0x400, scoped, tag = 'output window, operand 0, single buffered']
    %6 = vsyncpa [#allocation4], 0
    %7 = vsyncpa [#allocation5], 0
    // Predicated region
    $region2: #{tpu_custom_call.1} parent=1 // pred_check
      _
    $region3: #{tpu_custom_call.1} parent=1 // pred_check_branch
      %9 = sbr.rel (0) target = $region5
    $region4: #{tpu_custom_call.1} parent=1 // pred_region
      %s11 = ssub.s32 4096, 4096
      %12 = vsyncadd [#allocation4], %s11
      %s13 = sshll.u32 [#allocation3], 4
      %s14 = int_to_ptr.vmem [resolvable:$true] %s13
      %19 = dma.hbm_to_vmem [thread:$0]  %s0, 4096, %s14, [#allocation4], 256, 256, 16
    $region5: #{tpu_custom_call.1} parent=1 // pred_fallthru
      _
    // Predicated region
    $region6: #{tpu_custom_call.1} parent=1 // pred_check
      _
    $region7: #{tpu_custom_call.1} parent=1 // pred_check_branch
      %21 = sbr.rel (0) target = $region9
    $region8: #{tpu_custom_call.1} parent=1 // pred_region
      %22 = dma.done [#allocation4], 4096
    $region9: #{tpu_custom_call.1} parent=1 // pred_fallthru
      _
    %p23 = scmp.eq.s32.totalorder 0, 0
    // Predicated region
    $region10: #{tpu_custom_call.1} parent=1 // pred_check
      %p24 = pneg %p23
    $region11: #{tpu_custom_call.1} parent=1 // pred_check_branch
      %26 = sbr.rel (%p24) target = $region13
    $region12: #{tpu_custom_call.1} parent=1 // pred_region
      %27 = vst [vmem:[#allocation2] sm:$0x3] 0.0
    $region13: #{tpu_custom_call.1} parent=1 // pred_fallthru
      _
    %v28 = vld [vmem:[#allocation3] sm:$0xff]
    %v29 = vld [vmem:[#allocation3 + $0x8] sm:$0xff]
    %v30 = vld [vmem:[#allocation3 + $0x10] sm:$0xff]
    %v31 = vld [vmem:[#allocation3 + $0x18] sm:$0xff]
    %v32 = vld [vmem:[#allocation3 + $0x20] sm:$0xff]
    %v33 = vld [vmem:[#allocation3 + $0x28] sm:$0xff]
    %v34 = vld [vmem:[#allocation3 + $0x30] sm:$0xff]
    %v35 = vld [vmem:[#allocation3 + $0x38] sm:$0xff]
    %v36 = vld [vmem:[#allocation3 + $0x40] sm:$0xff]
    %v37 = vld [vmem:[#allocation3 + $0x48] sm:$0xff]
    %v38 = vld [vmem:[#allocation3 + $0x50] sm:$0xff]
    %v39 = vld [vmem:[#allocation3 + $0x58] sm:$0xff]
    %v40 = vld [vmem:[#allocation3 + $0x60] sm:$0xff]
    %v41 = vld [vmem:[#allocation3 + $0x68] sm:$0xff]
    %v42 = vld [vmem:[#allocation3 + $0x70] sm:$0xff]
    %v43 = vld [vmem:[#allocation3 + $0x78] sm:$0xff]
    %v44 = vld [vmem:[#allocation3 + $0x80] sm:$0xff]
    %v45 = vld [vmem:[#allocation3 + $0x88] sm:$0xff]
    %v46 = vld [vmem:[#allocation3 + $0x90] sm:$0xff]
    %v47 = vld [vmem:[#allocation3 + $0x98] sm:$0xff]
    %v48 = vld [vmem:[#allocation3 + $0xa0] sm:$0xff]
    %v49 = vld [vmem:[#allocation3 + $0xa8] sm:$0xff]
    %v50 = vld [vmem:[#allocation3 + $0xb0] sm:$0xff]
    %v51 = vld [vmem:[#allocation3 + $0xb8] sm:$0xff]
    %v52 = vld [vmem:[#allocation3 + $0xc0] sm:$0xff]
    %v53 = vld [vmem:[#allocation3 + $0xc8] sm:$0xff]
    %v54 = vld [vmem:[#allocation3 + $0xd0] sm:$0xff]
    %v55 = vld [vmem:[#allocation3 + $0xd8] sm:$0xff]
    %v56 = vld [vmem:[#allocation3 + $0xe0] sm:$0xff]
    %v57 = vld [vmem:[#allocation3 + $0xe8] sm:$0xff]
    %v58 = vld [vmem:[#allocation3 + $0xf0] sm:$0xff]
    %v59 = vld [vmem:[#allocation3 + $0xf8] sm:$0xff]
    %v60 = vld [vmem:[#allocation2] sm:$0x1]
    %v61 = vadd.f32 %v28, %v29
    %62 = vadd.xlane.f32.xlu0 %v61
    %v63 = vpop.xlane.xlu0 %62
    %v64 = vadd.f32 %v30, %v31
    %65 = vadd.xlane.f32.xlu0 %v64
    %v66 = vpop.xlane.xlu0 %65
    %v67 = vadd.f32 %v32, %v33
    %68 = vadd.xlane.f32.xlu0 %v67
    %v69 = vpop.xlane.xlu0 %68
    %v70 = vadd.f32 %v34, %v35
    %71 = vadd.xlane.f32.xlu0 %v70
    %v72 = vpop.xlane.xlu0 %71
    %v73 = vadd.f32 %v36, %v37
    %74 = vadd.xlane.f32.xlu0 %v73
    %v75 = vpop.xlane.xlu0 %74
    %v76 = vadd.f32 %v38, %v39
    %77 = vadd.xlane.f32.xlu0 %v76
    %v78 = vpop.xlane.xlu0 %77
    %v79 = vadd.f32 %v40, %v41
    %80 = vadd.xlane.f32.xlu0 %v79
    %v81 = vpop.xlane.xlu0 %80
    %v82 = vadd.f32 %v42, %v43
    %83 = vadd.xlane.f32.xlu0 %v82
    %v84 = vpop.xlane.xlu0 %83
    %v85 = vadd.f32 %v44, %v45
    %86 = vadd.xlane.f32.xlu0 %v85
    %v87 = vpop.xlane.xlu0 %86
    %v88 = vadd.f32 %v46, %v47
    %89 = vadd.xlane.f32.xlu0 %v88
    %v90 = vpop.xlane.xlu0 %89
    %v91 = vadd.f32 %v48, %v49
    %92 = vadd.xlane.f32.xlu0 %v91
    %v93 = vpop.xlane.xlu0 %92
    %v94 = vadd.f32 %v50, %v51
    %95 = vadd.xlane.f32.xlu0 %v94
    %v96 = vpop.xlane.xlu0 %95
    %v97 = vadd.f32 %v52, %v53
    %98 = vadd.xlane.f32.xlu0 %v97
    %v99 = vpop.xlane.xlu0 %98
    %v100 = vadd.f32 %v54, %v55
    %101 = vadd.xlane.f32.xlu0 %v100
    %v102 = vpop.xlane.xlu0 %101
    %v103 = vadd.f32 %v56, %v57
    %104 = vadd.xlane.f32.xlu0 %v103
    %v105 = vpop.xlane.xlu0 %104
    %v106 = vadd.f32 %v58, %v59
    %107 = vadd.xlane.f32.xlu0 %v106
    %v108 = vpop.xlane.xlu0 %107
    %v125 = vlaneseq
    %v126 = vand.u32 %v125, 127
    %v127 = vlaneseq
    %v128 = vshrl.u32 %v127, 7
    %v129 = vsub.s32 %v126, %v128
    %v130 = vrot.slane %v63, %v129
    %v131 = vadd.s32 %v126, 4294967288
    %v132 = vlaneseq
    %v133 = vshrl.u32 %v132, 7
    %v134 = vsub.s32 %v131, %v133
    %v135 = vrot.slane %v66, %v134
    %vm136 = vcmask 130112
    %v137 = vsel %vm136, %v135, %v130
    %v138 = vadd.s32 %v126, 4294967280
    %v139 = vlaneseq
    %v140 = vshrl.u32 %v139, 7
    %v141 = vsub.s32 %v138, %v140
    %v142 = vrot.slane %v69, %v141
    %vm143 = vcmask 195712
    %v144 = vsel %vm143, %v142, %v137
    %v145 = vadd.s32 %v126, 4294967272
    %v146 = vlaneseq
    %v147 = vshrl.u32 %v146, 7
    %v148 = vsub.s32 %v145, %v147
    %v149 = vrot.slane %v72, %v148
    %vm150 = vcmask 261312
    %v151 = vsel %vm150, %v149, %v144
    %v152 = vadd.s32 %v126, 4294967264
    %v153 = vlaneseq
    %v154 = vshrl.u32 %v153, 7
    %v155 = vsub.s32 %v152, %v154
    %v156 = vrot.slane %v75, %v155
    %vm157 = vcmask 326912
    %v158 = vsel %vm157, %v156, %v151
    %v159 = vadd.s32 %v126, 4294967256
    %v160 = vlaneseq
    %v161 = vshrl.u32 %v160, 7
    %v162 = vsub.s32 %v159, %v161
    %v163 = vrot.slane %v78, %v162
    %vm164 = vcmask 392512
    %v165 = vsel %vm164, %v163, %v158
    %v166 = vadd.s32 %v126, 4294967248
    %v167 = vlaneseq
    %v168 = vshrl.u32 %v167, 7
    %v169 = vsub.s32 %v166, %v168
    %v170 = vrot.slane %v81, %v169
    %vm171 = vcmask 458112
    %v172 = vsel %vm171, %v170, %v165
    %v173 = vadd.s32 %v126, 4294967240
    %v174 = vlaneseq
    %v175 = vshrl.u32 %v174, 7
    %v176 = vsub.s32 %v173, %v175
    %v177 = vrot.slane %v84, %v176
    %vm178 = vcmask 523712
    %v179 = vsel %vm178, %v177, %v172
    %v180 = vadd.s32 %v126, 4294967232
    %v181 = vlaneseq
    %v182 = vshrl.u32 %v181, 7
    %v183 = vsub.s32 %v180, %v182
    %v184 = vrot.slane %v87, %v183
    %vm185 = vcmask 589312
    %v186 = vsel %vm185, %v184, %v179
    %v187 = vadd.s32 %v126, 4294967224
    %v188 = vlaneseq
    %v189 = vshrl.u32 %v188, 7
    %v190 = vsub.s32 %v187, %v189
    %v191 = vrot.slane %v90, %v190
    %vm192 = vcmask 654912
    %v193 = vsel %vm192, %v191, %v186
    %v194 = vadd.s32 %v126, 4294967216
    %v195 = vlaneseq
    %v196 = vshrl.u32 %v195, 7
    %v197 = vsub.s32 %v194, %v196
    %v198 = vrot.slane %v93, %v197
    %vm199 = vcmask 720512
    %v200 = vsel %vm199, %v198, %v193
    %v201 = vadd.s32 %v126, 4294967208
    %v202 = vlaneseq
    %v203 = vshrl.u32 %v202, 7
    %v204 = vsub.s32 %v201, %v203
    %v205 = vrot.slane %v96, %v204
    %vm206 = vcmask 786112
    %v207 = vsel %vm206, %v205, %v200
    %v208 = vadd.s32 %v126, 4294967200
    %v209 = vlaneseq
    %v210 = vshrl.u32 %v209, 7
    %v211 = vsub.s32 %v208, %v210
    %v212 = vrot.slane %v99, %v211
    %vm213 = vcmask 851712
    %v214 = vsel %vm213, %v212, %v207
    %v215 = vadd.s32 %v126, 4294967192
    %v216 = vlaneseq
    %v217 = vshrl.u32 %v216, 7
    %v218 = vsub.s32 %v215, %v217
    %v219 = vrot.slane %v102, %v218
    %vm220 = vcmask 917312
    %v221 = vsel %vm220, %v219, %v214
    %v222 = vadd.s32 %v126, 4294967184
    %v223 = vlaneseq
    %v224 = vshrl.u32 %v223, 7
    %v225 = vsub.s32 %v222, %v224
    %v226 = vrot.slane %v105, %v225
    %vm227 = vcmask 982912
    %v228 = vsel %vm227, %v226, %v221
    %v229 = vadd.s32 %v126, 4294967176
    %v230 = vlaneseq
    %v231 = vshrl.u32 %v230, 7
    %v232 = vsub.s32 %v229, %v231
    %v233 = vrot.slane %v108, %v232
    %vm234 = vcmask 1048512
    %v235 = vsel %vm234, %v233, %v228
    %v237 = vadd.f32 %v60, %v235
    %238 = vst [vmem:[#allocation2] sm:$0x1] %v237
    %v239 = vld [vmem:[#allocation2 + $0x1] sm:$0x1]
    %v240 = vmul.f32 %v28, %v28
    %v241 = vmul.f32 %v29, %v29
    %v242 = vmul.f32 %v30, %v30
    %v243 = vmul.f32 %v31, %v31
    %v244 = vmul.f32 %v32, %v32
    %v245 = vmul.f32 %v33, %v33
    %v246 = vmul.f32 %v34, %v34
    %v247 = vmul.f32 %v35, %v35
    %v248 = vmul.f32 %v36, %v36
    %v249 = vmul.f32 %v37, %v37
    %v250 = vmul.f32 %v38, %v38
    %v251 = vmul.f32 %v39, %v39
    %v252 = vmul.f32 %v40, %v40
    %v253 = vmul.f32 %v41, %v41
    %v254 = vmul.f32 %v42, %v42
    %v255 = vmul.f32 %v43, %v43
    %v256 = vmul.f32 %v44, %v44
    %v257 = vmul.f32 %v45, %v45
    %v258 = vmul.f32 %v46, %v46
    %v259 = vmul.f32 %v47, %v47
    %v260 = vmul.f32 %v48, %v48
    %v261 = vmul.f32 %v49, %v49
    %v262 = vmul.f32 %v50, %v50
    %v263 = vmul.f32 %v51, %v51
    %v264 = vmul.f32 %v52, %v52
    %v265 = vmul.f32 %v53, %v53
    %v266 = vmul.f32 %v54, %v54
    %v267 = vmul.f32 %v55, %v55
    %v268 = vmul.f32 %v56, %v56
    %v269 = vmul.f32 %v57, %v57
    %v270 = vmul.f32 %v58, %v58
    %v271 = vmul.f32 %v59, %v59
    %v272 = vadd.f32 %v240, %v241
    %273 = vadd.xlane.f32.xlu0 %v272
    %v274 = vpop.xlane.xlu0 %273
    %v275 = vadd.f32 %v242, %v243
    %276 = vadd.xlane.f32.xlu0 %v275
    %v277 = vpop.xlane.xlu0 %276
    %v278 = vadd.f32 %v244, %v245
    %279 = vadd.xlane.f32.xlu0 %v278
    %v280 = vpop.xlane.xlu0 %279
    %v281 = vadd.f32 %v246, %v247
    %282 = vadd.xlane.f32.xlu0 %v281
    %v283 = vpop.xlane.xlu0 %282
    %v284 = vadd.f32 %v248, %v249
    %285 = vadd.xlane.f32.xlu0 %v284
    %v286 = vpop.xlane.xlu0 %285
    %v287 = vadd.f32 %v250, %v251
    %288 = vadd.xlane.f32.xlu0 %v287
    %v289 = vpop.xlane.xlu0 %288
    %v290 = vadd.f32 %v252, %v253
    %291 = vadd.xlane.f32.xlu0 %v290
    %v292 = vpop.xlane.xlu0 %291
    %v293 = vadd.f32 %v254, %v255
    %294 = vadd.xlane.f32.xlu0 %v293
    %v295 = vpop.xlane.xlu0 %294
    %v296 = vadd.f32 %v256, %v257
    %297 = vadd.xlane.f32.xlu0 %v296
    %v298 = vpop.xlane.xlu0 %297
    %v299 = vadd.f32 %v258, %v259
    %300 = vadd.xlane.f32.xlu0 %v299
    %v301 = vpop.xlane.xlu0 %300
    %v302 = vadd.f32 %v260, %v261
    %303 = vadd.xlane.f32.xlu0 %v302
    %v304 = vpop.xlane.xlu0 %303
    %v305 = vadd.f32 %v262, %v263
    %306 = vadd.xlane.f32.xlu0 %v305
    %v307 = vpop.xlane.xlu0 %306
    %v308 = vadd.f32 %v264, %v265
    %309 = vadd.xlane.f32.xlu0 %v308
    %v310 = vpop.xlane.xlu0 %309
    %v311 = vadd.f32 %v266, %v267
    %312 = vadd.xlane.f32.xlu0 %v311
    %v313 = vpop.xlane.xlu0 %312
    %v314 = vadd.f32 %v268, %v269
    %315 = vadd.xlane.f32.xlu0 %v314
    %v316 = vpop.xlane.xlu0 %315
    %v317 = vadd.f32 %v270, %v271
    %318 = vadd.xlane.f32.xlu0 %v317
    %v319 = vpop.xlane.xlu0 %318
    %v336 = vlaneseq
    %v337 = vshrl.u32 %v336, 7
    %v338 = vsub.s32 %v126, %v337
    %v339 = vrot.slane %v274, %v338
    %v340 = vlaneseq
    %v341 = vshrl.u32 %v340, 7
    %v342 = vsub.s32 %v131, %v341
    %v343 = vrot.slane %v277, %v342
    %v344 = vsel %vm136, %v343, %v339
    %v345 = vlaneseq
    %v346 = vshrl.u32 %v345, 7
    %v347 = vsub.s32 %v138, %v346
    %v348 = vrot.slane %v280, %v347
    %v349 = vsel %vm143, %v348, %v344
    %v350 = vlaneseq
    %v351 = vshrl.u32 %v350, 7
    %v352 = vsub.s32 %v145, %v351
    %v353 = vrot.slane %v283, %v352
    %v354 = vsel %vm150, %v353, %v349
    %v355 = vlaneseq
    %v356 = vshrl.u32 %v355, 7
    %v357 = vsub.s32 %v152, %v356
    %v358 = vrot.slane %v286, %v357
    %v359 = vsel %vm157, %v358, %v354
    %v360 = vlaneseq
    %v361 = vshrl.u32 %v360, 7
    %v362 = vsub.s32 %v159, %v361
    %v363 = vrot.slane %v289, %v362
    %v364 = vsel %vm164, %v363, %v359
    %v365 = vlaneseq
    %v366 = vshrl.u32 %v365, 7
    %v367 = vsub.s32 %v166, %v366
    %v368 = vrot.slane %v292, %v367
    %v369 = vsel %vm171, %v368, %v364
    %v370 = vlaneseq
    %v371 = vshrl.u32 %v370, 7
    %v372 = vsub.s32 %v173, %v371
    %v373 = vrot.slane %v295, %v372
    %v374 = vsel %vm178, %v373, %v369
    %v375 = vlaneseq
    %v376 = vshrl.u32 %v375, 7
    %v377 = vsub.s32 %v180, %v376
    %v378 = vrot.slane %v298, %v377
    %v379 = vsel %vm185, %v378, %v374
    %v380 = vlaneseq
    %v381 = vshrl.u32 %v380, 7
    %v382 = vsub.s32 %v187, %v381
    %v383 = vrot.slane %v301, %v382
    %v384 = vsel %vm192, %v383, %v379
    %v385 = vlaneseq
    %v386 = vshrl.u32 %v385, 7
    %v387 = vsub.s32 %v194, %v386
    %v388 = vrot.slane %v304, %v387
    %v389 = vsel %vm199, %v388, %v384
    %v390 = vlaneseq
    %v391 = vshrl.u32 %v390, 7
    %v392 = vsub.s32 %v201, %v391
    %v393 = vrot.slane %v307, %v392
    %v394 = vsel %vm206, %v393, %v389
    %v395 = vlaneseq
    %v396 = vshrl.u32 %v395, 7
    %v397 = vsub.s32 %v208, %v396
    %v398 = vrot.slane %v310, %v397
    %v399 = vsel %vm213, %v398, %v394
    %v400 = vlaneseq
    %v401 = vshrl.u32 %v400, 7
    %v402 = vsub.s32 %v215, %v401
    %v403 = vrot.slane %v313, %v402
    %v404 = vsel %vm220, %v403, %v399
    %v405 = vlaneseq
    %v406 = vshrl.u32 %v405, 7
    %v407 = vsub.s32 %v222, %v406
    %v408 = vrot.slane %v316, %v407
    %v409 = vsel %vm227, %v408, %v404
    %v410 = vlaneseq
    %v411 = vshrl.u32 %v410, 7
    %v412 = vsub.s32 %v229, %v411
    %v413 = vrot.slane %v319, %v412
    %v414 = vsel %vm234, %v413, %v409
    %v416 = vadd.f32 %v239, %v414
    %417 = vst [vmem:[#allocation2 + $0x1] sm:$0x1] %v416
    // Predicated region
    $region14: #{tpu_custom_call.1} parent=1 // pred_check
      %p418 = pneg %p23
    $region15: #{tpu_custom_call.1} parent=1 // pred_check_branch
      %420 = sbr.rel (%p418) target = $region17
    $region16: #{tpu_custom_call.1} parent=1 // pred_region
      %v421 = vld [vmem:[#allocation2] sm:$0x1]
      %v422 = vmul.f32 %v421, 0.00390625
      %v423 = vld [vmem:[#allocation2 + $0x1] sm:$0x1]
      %v424 = vmul.f32 %v422, 256.0
      %v425 = vmul.f32 %v424, %v422
      %v426 = vsub.f32 %v423, %v425
      %v427 = vrcp.pop 255.0
      %v428 = vmul.f32 %v426, %v427
      %v429 = vmax.f32 %v428, 0.0
      %430 = vst [vmem:[#allocation6] sm:$0x1] %v422
      %v431 = vrsqrt.pop %v429
      %v432 = vmul.f32 %v429, %v431
      %vm433 = vcmp.eq.f32.partialorder %v429, inf
      %v434 = vsel %vm433, %v429, %v432
      %vm435 = vcmp.eq.f32.partialorder %v429, 0.0
      %v436 = vand.u32 %v429, 2147483648
      %v437 = vsel %vm435, %v436, %v434
      %438 = vst [vmem:[#allocation6 + $0x1] sm:$0x1] %v437
    $region17: #{tpu_custom_call.1} parent=1 // pred_fallthru
      _
    // Predicated region
    $region18: #{tpu_custom_call.1} parent=1 // pred_check
      _
    $region19: #{tpu_custom_call.1} parent=1 // pred_check_branch
      %440 = sbr.rel (0) target = $region21
    $region20: #{tpu_custom_call.1} parent=1 // pred_region
      %s442 = ssub.s32 32, 32
      %443 = vsyncadd [#allocation5], %s442
      %s445 = sshll.u32 [#allocation6], 4
      %s446 = int_to_ptr.vmem [resolvable:$true] %s445
      %448 = dma.vmem_to_hbm [thread:$0]  %s446, 32, %s1, [#allocation5]
    $region21: #{tpu_custom_call.1} parent=1 // pred_fallthru
      _
    // Predicated region
    $region22: #{tpu_custom_call.1} parent=1 // pred_check
      _
    $region23: #{tpu_custom_call.1} parent=1 // pred_check_branch
      %450 = sbr.rel (0) target = $region25
    $region24: #{tpu_custom_call.1} parent=1 // pred_region
      %451 = dma.done [#allocation5], 32
    $region25: #{tpu_custom_call.1} parent=1 // pred_fallthru
      _
    %452 = vsyncpa [#allocation4], 1
    %453 = vsyncpa [#allocation5], 1

</llo_original>
